<compile_context>
chip_gen: v7x
topology: tpu7x:2x2x1
jax: 0.10.0
libtpu: 0.0.40
codegen_flags: <defaults>
</compile_context>

<pallas_src>
import functools

import jax
import jax.numpy as jnp
from jax.experimental import pallas as pl
from jax.experimental.pallas import tpu as pltpu


_LANE = 512                      # lane-dense width (multiple of 128)
_VMEM_BUDGET = 20 * 1024 * 1024  # double-buffered (input + band-major output) tile budget
_MAX_TILE_R = 512


def _round_up(v, m):
    return ((v + m - 1) // m) * m


def _sublane_rows(dtype):
    # sublane packing: 8 rows for 4-byte, 16 for 2-byte, 32 for 1-byte dtypes
    return max(8, 32 // jnp.dtype(dtype).itemsize)


def _pos_emb_kernel(x_ref, o_ref, *, freq_bands, use_double_angle):
    # x_ref: (TILE_R, LANE) lane-dense tile.  o_ref: (n_bands, TILE_R, LANE).
    # Stream each band straight to its output slab; no concatenate, small live set.
    x = x_ref[...].astype(jnp.float32)
    o_ref[0] = x.astype(o_ref.dtype)
    if use_double_angle:
        # Power-of-two bands: seed with sin/cos of f0*x (2 transcendentals total),
        # then generate higher bands with the double-angle recurrence on the VPU.
        s = jnp.sin(freq_bands[0] * x)
        c = jnp.cos(freq_bands[0] * x)
        o_ref[1] = s.astype(o_ref.dtype)
        o_ref[2] = c.astype(o_ref.dtype)
        for k in range(1, len(freq_bands)):
            s, c = 2.0 * s * c, (c - s) * (c + s)
            o_ref[1 + 2 * k] = s.astype(o_ref.dtype)
            o_ref[2 + 2 * k] = c.astype(o_ref.dtype)
    else:
        for k, f in enumerate(freq_bands):
            fx = f * x
            o_ref[1 + 2 * k] = jnp.sin(fx).astype(o_ref.dtype)
            o_ref[2 + 2 * k] = jnp.cos(fx).astype(o_ref.dtype)


def positional_embedding(x, n_freq, log=True, use_double_angle=None):
    """Pallas equivalent of Positional_Embedding(n_freq, log).forward(x).

    x: (B, S, D) -> (B, S, D * (1 + 2 * n_freq)) with the PyTorch concat layout:
    out[..., 0:D] = x, out[..., (1+2k)*D:(2+2k)*D] = sin(f_k*x), then cos(f_k*x).
    """
    if log:
        freqs = tuple(float(2.0 ** i) for i in range(n_freq))
    else:
        freqs = tuple(
            float(v) for v in jnp.linspace(2.0 ** 0, 2.0 ** (n_freq - 1), n_freq)
        )

    if use_double_angle is None:
        # Recurrence error grows ~2^band; keep it on only where it stays tiny.
        use_double_angle = bool(log) and n_freq <= 8
    use_double_angle = bool(use_double_angle and log and n_freq > 1)

    n_bands = 1 + 2 * n_freq
    B, S, D = x.shape
    N = B * S * D
    itemsize = jnp.dtype(x.dtype).itemsize
    sublane = _sublane_rows(x.dtype)

    # ---- lane-dense flattened view & row tiling -------------------------------
    L = _LANE
    rows_needed = -(-N // L)

    # Size tiles against the (1 + n_bands)x double-buffered VMEM footprint.
    bytes_per_row = L * itemsize * (1 + n_bands)
    tile_r = (_VMEM_BUDGET // (2 * bytes_per_row)) // sublane * sublane
    tile_r = max(sublane, min(_MAX_TILE_R, tile_r))
    tile_r = min(tile_r, _round_up(rows_needed, sublane))

    num_tiles = -(-rows_needed // tile_r)
    # v7x has 2 TensorCores: give the "parallel" axis >= 2 tiles when there is work.
    if num_tiles < 2 and rows_needed > sublane:
        num_tiles = 2
    # Rebalance tile_r downwards to minimize row padding (stays within budget).
    tile_r = max(sublane, _round_up(-(-rows_needed // num_tiles), sublane))
    num_tiles = -(-rows_needed // tile_r)
    R = num_tiles * tile_r

    pad = R * L - N
    x_flat = x.reshape(-1)
    if pad:
        x_flat = jnp.pad(x_flat, (0, pad))
    x2d = x_flat.reshape(R, L)

    kernel = functools.partial(
        _pos_emb_kernel, freq_bands=freqs, use_double_angle=use_double_angle
    )

    cost = pl.CostEstimate(
        flops=6 * n_bands * R * L,
        transcendentals=(2 if use_double_angle else 2 * n_freq) * R * L,
        bytes_accessed=(1 + n_bands) * R * L * itemsize,
    )

    out_bands = pl.pallas_call(
        kernel,
        out_shape=jax.ShapeDtypeStruct((n_bands, R, L), x.dtype),
        grid=(num_tiles,),
        in_specs=[pl.BlockSpec((tile_r, L), lambda r: (r, 0))],
        out_specs=pl.BlockSpec((n_bands, tile_r, L), lambda r: (0, r, 0)),
        compiler_params=pltpu.CompilerParams(
            dimension_semantics=("parallel",),
            vmem_limit_bytes=32 * 1024 * 1024,
        ),
        cost_estimate=cost,
    )(x2d)

    # Recover the PyTorch concat layout outside the kernel:
    # band-major (n_bands, N) -> (B, S, n_bands, D) -> (B, S, n_bands*D).
    out = out_bands.reshape(n_bands, R * L)[:, :N].reshape(n_bands, B, S, D)
    out = jnp.transpose(out, (1, 2, 0, 3)).reshape(B, S, n_bands * D)
    return out


def _reference(x, n_freq, log=True):
    if log:
        freqs = 2.0 ** jnp.linspace(0.0, n_freq - 1, n_freq)
    else:
        freqs = jnp.linspace(2.0 ** 0, 2.0 ** (n_freq - 1), n_freq)
    out = [x]
    for f in freqs:
        out.append(jnp.sin(f * x))
        out.append(jnp.cos(f * x))
    return jnp.concatenate(out, axis=-1)


if __name__ == "__main__":
    key = jax.random.PRNGKey(0)
    n_freq = 4
    # small shapes consistent with the module: batch=2, seq=8, feature dim=4
    x = jax.random.normal(key, (2, 8, 4), dtype=jnp.float32)

    ref = _reference(x, n_freq=n_freq, log=True)

    # Default path (log-spaced bands -> double-angle recurrence).
    out = jax.block_until_ready(positional_embedding(x, n_freq=n_freq, log=True))
    assert out.shape == (2, 8, 4 * (1 + 2 * n_freq)), out.shape
    assert jnp.allclose(out, ref, atol=1e-4, rtol=1e-5), float(
        jnp.max(jnp.abs(out - ref))
    )

    # Exact sin/cos path.
    out_exact = jax.block_until_ready(
        positional_embedding(x, n_freq=n_freq, log=True, use_double_angle=False)
    )
    assert jnp.allclose(out_exact, ref, atol=1e-5, rtol=1e-5)

    # Linear (log=False) bands.
    ref_lin = _reference(x, n_freq=n_freq, log=False)
    out_lin = jax.block_until_ready(
        positional_embedding(x, n_freq=n_freq, log=False)
    )
    assert jnp.allclose(out_lin, ref_lin, atol=1e-5, rtol=1e-5)

    print("KERNEL_OK")
</pallas_src>

<mosaic_0001>
module attributes {stable_mosaic.version = 11 : i64} {
  func.func @_pos_emb_kernel(%arg0: i32, %arg1: memref<8x512xf32, #tpu.memory_space<vmem>>, %arg2: memref<9x8x512xf32, #tpu.memory_space<vmem>>) attributes {dimension_semantics = [#tpu.dimension_semantics<parallel>], iteration_bounds = array<i64: 1>, scalar_prefetch = 0 : i64, scratch_operands = 0 : i64, tpu.core_type = #tpu.core_type<tc>, window_params = [{transform_indices = @transform_0, window_bounds = array<i64: 8, 512>}, {transform_indices = @transform_1, window_bounds = array<i64: 9, 8, 512>}]} {
    %c0 = arith.constant 0 : index
    %c0_0 = arith.constant 0 : index
    %0 = vector.load %arg1[%c0, %c0_0] : memref<8x512xf32, #tpu.memory_space<vmem>>, vector<8x512xf32>
    %c0_1 = arith.constant 0 : index
    %c0_2 = arith.constant 0 : index
    %c0_3 = arith.constant 0 : index
    %1 = vector.load %arg2[%c0_1, %c0_2, %c0_3] : memref<9x8x512xf32, #tpu.memory_space<vmem>>, vector<1x8x512xf32>
    %2 = vector.shape_cast %1 : vector<1x8x512xf32> to vector<8x512xf32>
    %3 = vector.shape_cast %0 : vector<8x512xf32> to vector<1x8x512xf32>
    tpu.vector_store %arg2[%c0_1, %c0_2, %c0_3], %3 {strides = array<i32>} : memref<9x8x512xf32, #tpu.memory_space<vmem>>, vector<1x8x512xf32>,
    %cst = arith.constant 1.000000e+00 : f32
    %4 = vector.broadcast %cst : f32 to vector<8x512xf32>
    %5 = arith.mulf %4, %0 : vector<8x512xf32>
    %6 = math.sin %5 : vector<8x512xf32>
    %cst_4 = arith.constant 1.000000e+00 : f32
    %7 = vector.broadcast %cst_4 : f32 to vector<8x512xf32>
    %8 = arith.mulf %7, %0 : vector<8x512xf32>
    %9 = math.cos %8 : vector<8x512xf32>
    %c1 = arith.constant 1 : index
    %c0_5 = arith.constant 0 : index
    %c0_6 = arith.constant 0 : index
    %10 = vector.load %arg2[%c1, %c0_5, %c0_6] : memref<9x8x512xf32, #tpu.memory_space<vmem>>, vector<1x8x512xf32>
    %11 = vector.shape_cast %10 : vector<1x8x512xf32> to vector<8x512xf32>
    %12 = vector.shape_cast %6 : vector<8x512xf32> to vector<1x8x512xf32>
    tpu.vector_store %arg2[%c1, %c0_5, %c0_6], %12 {strides = array<i32>} : memref<9x8x512xf32, #tpu.memory_space<vmem>>, vector<1x8x512xf32>,
    %c2 = arith.constant 2 : index
    %c0_7 = arith.constant 0 : index
    %c0_8 = arith.constant 0 : index
    %13 = vector.load %arg2[%c2, %c0_7, %c0_8] : memref<9x8x512xf32, #tpu.memory_space<vmem>>, vector<1x8x512xf32>
    %14 = vector.shape_cast %13 : vector<1x8x512xf32> to vector<8x512xf32>
    %15 = vector.shape_cast %9 : vector<8x512xf32> to vector<1x8x512xf32>
    tpu.vector_store %arg2[%c2, %c0_7, %c0_8], %15 {strides = array<i32>} : memref<9x8x512xf32, #tpu.memory_space<vmem>>, vector<1x8x512xf32>,
    %cst_9 = arith.constant 2.000000e+00 : f32
    %16 = vector.broadcast %cst_9 : f32 to vector<8x512xf32>
    %17 = arith.mulf %16, %6 : vector<8x512xf32>
    %18 = arith.mulf %17, %9 : vector<8x512xf32>
    %19 = arith.subf %9, %6 : vector<8x512xf32>
    %20 = arith.addf %9, %6 : vector<8x512xf32>
    %21 = arith.mulf %19, %20 : vector<8x512xf32>
    %c3 = arith.constant 3 : index
    %c0_10 = arith.constant 0 : index
    %c0_11 = arith.constant 0 : index
    %22 = vector.load %arg2[%c3, %c0_10, %c0_11] : memref<9x8x512xf32, #tpu.memory_space<vmem>>, vector<1x8x512xf32>
    %23 = vector.shape_cast %22 : vector<1x8x512xf32> to vector<8x512xf32>
    %24 = vector.shape_cast %18 : vector<8x512xf32> to vector<1x8x512xf32>
    tpu.vector_store %arg2[%c3, %c0_10, %c0_11], %24 {strides = array<i32>} : memref<9x8x512xf32, #tpu.memory_space<vmem>>, vector<1x8x512xf32>,
    %c4 = arith.constant 4 : index
    %c0_12 = arith.constant 0 : index
    %c0_13 = arith.constant 0 : index
    %25 = vector.load %arg2[%c4, %c0_12, %c0_13] : memref<9x8x512xf32, #tpu.memory_space<vmem>>, vector<1x8x512xf32>
    %26 = vector.shape_cast %25 : vector<1x8x512xf32> to vector<8x512xf32>
    %27 = vector.shape_cast %21 : vector<8x512xf32> to vector<1x8x512xf32>
    tpu.vector_store %arg2[%c4, %c0_12, %c0_13], %27 {strides = array<i32>} : memref<9x8x512xf32, #tpu.memory_space<vmem>>, vector<1x8x512xf32>,
    %cst_14 = arith.constant 2.000000e+00 : f32
    %28 = vector.broadcast %cst_14 : f32 to vector<8x512xf32>
    %29 = arith.mulf %28, %18 : vector<8x512xf32>
    %30 = arith.mulf %29, %21 : vector<8x512xf32>
    %31 = arith.subf %21, %18 : vector<8x512xf32>
    %32 = arith.addf %21, %18 : vector<8x512xf32>
    %33 = arith.mulf %31, %32 : vector<8x512xf32>
    %c5 = arith.constant 5 : index
    %c0_15 = arith.constant 0 : index
    %c0_16 = arith.constant 0 : index
    %34 = vector.load %arg2[%c5, %c0_15, %c0_16] : memref<9x8x512xf32, #tpu.memory_space<vmem>>, vector<1x8x512xf32>
    %35 = vector.shape_cast %34 : vector<1x8x512xf32> to vector<8x512xf32>
    %36 = vector.shape_cast %30 : vector<8x512xf32> to vector<1x8x512xf32>
    tpu.vector_store %arg2[%c5, %c0_15, %c0_16], %36 {strides = array<i32>} : memref<9x8x512xf32, #tpu.memory_space<vmem>>, vector<1x8x512xf32>,
    %c6 = arith.constant 6 : index
    %c0_17 = arith.constant 0 : index
    %c0_18 = arith.constant 0 : index
    %37 = vector.load %arg2[%c6, %c0_17, %c0_18] : memref<9x8x512xf32, #tpu.memory_space<vmem>>, vector<1x8x512xf32>
    %38 = vector.shape_cast %37 : vector<1x8x512xf32> to vector<8x512xf32>
    %39 = vector.shape_cast %33 : vector<8x512xf32> to vector<1x8x512xf32>
    tpu.vector_store %arg2[%c6, %c0_17, %c0_18], %39 {strides = array<i32>} : memref<9x8x512xf32, #tpu.memory_space<vmem>>, vector<1x8x512xf32>,
    %cst_19 = arith.constant 2.000000e+00 : f32
    %40 = vector.broadcast %cst_19 : f32 to vector<8x512xf32>
    %41 = arith.mulf %40, %30 : vector<8x512xf32>
    %42 = arith.mulf %41, %33 : vector<8x512xf32>
    %43 = arith.subf %33, %30 : vector<8x512xf32>
    %44 = arith.addf %33, %30 : vector<8x512xf32>
    %45 = arith.mulf %43, %44 : vector<8x512xf32>
    %c7 = arith.constant 7 : index
    %c0_20 = arith.constant 0 : index
    %c0_21 = arith.constant 0 : index
    %46 = vector.load %arg2[%c7, %c0_20, %c0_21] : memref<9x8x512xf32, #tpu.memory_space<vmem>>, vector<1x8x512xf32>
    %47 = vector.shape_cast %46 : vector<1x8x512xf32> to vector<8x512xf32>
    %48 = vector.shape_cast %42 : vector<8x512xf32> to vector<1x8x512xf32>
    tpu.vector_store %arg2[%c7, %c0_20, %c0_21], %48 {strides = array<i32>} : memref<9x8x512xf32, #tpu.memory_space<vmem>>, vector<1x8x512xf32>,
    %c8 = arith.constant 8 : index
    %c0_22 = arith.constant 0 : index
    %c0_23 = arith.constant 0 : index
    %49 = vector.load %arg2[%c8, %c0_22, %c0_23] : memref<9x8x512xf32, #tpu.memory_space<vmem>>, vector<1x8x512xf32>
    %50 = vector.shape_cast %49 : vector<1x8x512xf32> to vector<8x512xf32>
    %51 = vector.shape_cast %45 : vector<8x512xf32> to vector<1x8x512xf32>
    tpu.vector_store %arg2[%c8, %c0_22, %c0_23], %51 {strides = array<i32>} : memref<9x8x512xf32, #tpu.memory_space<vmem>>, vector<1x8x512xf32>,
    return
  }
  func.func @transform_0(%arg0: i32) -> (i32, i32) {
    %c0_i32 = arith.constant 0 : i32
    %c0_i32_0 = arith.constant 0 : i32
    return %arg0, %c0_i32 : i32, i32
  }
  func.func @transform_1(%arg0: i32) -> (i32, i32, i32) {
    %c0_i32 = arith.constant 0 : i32
    %c0_i32_0 = arith.constant 0 : i32
    %c0_i32_1 = arith.constant 0 : i32
    return %c0_i32, %arg0, %c0_i32_0 : i32, i32, i32
  }
}

</mosaic_0001>

<llo_original>
// kernel: tpu_custom_call.1
$region0: #{tpu_custom_call.1}
  #allocation0 [shape = 'u32[]', space=smem, size = 0x4, offset = 0x4, fixed_abs, tag = 'smem constant byte address 0x4 - core index']
  #allocation1 [shape = 'u32[144,128]{1,0:T(1,128)}', space=vmem, size = 0x12000, scoped, tag = 'internal scratch']
  %s0 = inlined_call_operand.hbm [shape: f32[8,512], index: 0, kind: input, shape index: {}]
  %s1 = inlined_call_operand.hbm [shape: f32[9,8,512], index: 1, kind: output, shape index: {}]
  %s2 = sld [smem:[#allocation0]]
  $region18: #{tpu_custom_call.1} parent=0
    _
  %s4 = ssub.s32 1, %s2
  %s5 = scalar_select 0, %s4, %s2
  $region1: #{tpu_custom_call.1} parent=0
    #allocation2 [shape = 'u8[16384]{0}', space=vmem, size = 0x4000, scoped, tag = 'input window, operand 0, single buffered']
    #allocation3 [shape = 's32[1]{0}', space=sflag, size = 0x4, scoped, tag = 'scoped memory for tpu_custom_call.1']
    #allocation4 [shape = 's32[1]{0}', space=sflag, size = 0x4, scoped, tag = 'scoped memory for tpu_custom_call.1']
    #allocation5 [shape = 'u8[147456]{0}', space=vmem, size = 0x24000, scoped, tag = 'output window, operand 0, single buffered']
    %6 = vsyncpa [#allocation3], 0
    %7 = vsyncpa [#allocation4], 0
    // Predicated region
    $region2: #{tpu_custom_call.1} parent=1 // pred_check
      _
    $region3: #{tpu_custom_call.1} parent=1 // pred_check_branch
      %9 = sbr.rel (0) target = $region5
    $region4: #{tpu_custom_call.1} parent=1 // pred_region
      %s11 = ssub.s32 512, 512
      %12 = vsyncadd [#allocation3], %s11
      %s14 = sshll.u32 [#allocation2], 4
      %s15 = int_to_ptr.vmem [resolvable:$true] %s14
      %17 = dma.hbm_to_vmem [thread:$0]  %s0, 512, %s15, [#allocation3]
    $region5: #{tpu_custom_call.1} parent=1 // pred_fallthru
      _
    // Predicated region
    $region6: #{tpu_custom_call.1} parent=1 // pred_check
      _
    $region7: #{tpu_custom_call.1} parent=1 // pred_check_branch
      %19 = sbr.rel (0) target = $region9
    $region8: #{tpu_custom_call.1} parent=1 // pred_region
      %20 = dma.done [#allocation3], 512
    $region9: #{tpu_custom_call.1} parent=1 // pred_fallthru
      _
    %v21 = vld [vmem:[#allocation2] sm:$0xff]
    %v22 = vld [vmem:[#allocation2 + $0x8] sm:$0xff]
    %v23 = vld [vmem:[#allocation2 + $0x10] sm:$0xff]
    %v24 = vld [vmem:[#allocation2 + $0x18] sm:$0xff]
    %25 = vst [vmem:[#allocation5] sm:$0xff] %v21
    %26 = vst [vmem:[#allocation5 + $0x8] sm:$0xff] %v22
    %27 = vst [vmem:[#allocation5 + $0x10] sm:$0xff] %v23
    %28 = vst [vmem:[#allocation5 + $0x18] sm:$0xff] %v24
    %v29 = vand.u32 2147483647, %v21
    %vm30 = vcmp.le.f32.partialorder %v29, 0.7853982
    %vm31 = vcmp.lt.s32.totalorder %v21, 0
    %v32 = vand.u32 %v21, 2139095040
    %v33 = vshrl.u32 %v32, 23
    %v34 = vsub.s32 %v33, 127
    %v35 = vand.u32 2147483647, %v21
    %v36 = vand.u32 %v35, 8388607
    %v37 = vor.u32 %v36, 8388608
    %v38 = vsub.s32 0, %v37
    %v39 = vadd.s32 %v34, 1
    %vm40 = vcmp.gt.s32.totalorder %v39, 0
    %v41 = vsel %vm40, %v39, 0
    %v42 = vshrl.u32 %v41, 5
    %v43 = vand.u32 %v41, 31
    %v44 = vsub.s32 32, %v43
    %v45 = vshrl.u32 683565275, %v44
    %v46 = vshll.u32 683565275, %v43
    %v47 = vshrl.u32 2475754826, %v44
    %v48 = vor.u32 %v46, %v47
    %v49 = vshll.u32 2475754826, %v43
    %v50 = vshrl.u32 2131351028, %v44
    %v51 = vor.u32 %v49, %v50
    %v52 = vshll.u32 2131351028, %v43
    %v53 = vshrl.u32 2102212464, %v44
    %v54 = vor.u32 %v52, %v53
    %v55 = vshll.u32 2102212464, %v43
    %v56 = vshrl.u32 920167782, %v44
    %v57 = vor.u32 %v55, %v56
    %v58 = vshll.u32 920167782, %v43
    %v59 = vshrl.u32 1326507024, %v44
    %v60 = vor.u32 %v58, %v59
    %vm61 = vcmp.lt.s32.totalorder %v42, 1
    %vm62 = vcmp.lt.s32.totalorder %v42, 2
    %vm63 = vcmp.lt.s32.totalorder %v42, 3
    %vm64 = vcmp.lt.s32.totalorder %v42, 4
    %v65 = vsel %vm61, %v45, %v48
    %v66 = vsel %vm64, %v54, 2102212464
    %v67 = vsel %vm63, %v51, %v66
    %v68 = vsel %vm62, %v65, %v67
    %v69 = vsel %vm61, %v48, %v51
    %v70 = vsel %vm64, %v57, 920167782
    %v71 = vsel %vm63, %v54, %v70
    %v72 = vsel %vm62, %v69, %v71
    %v73 = vsel %vm61, %v51, %v54
    %v74 = vsel %vm64, %v60, 1326507024
    %v75 = vsel %vm63, %v57, %v74
    %v76 = vsel %vm62, %v73, %v75
    %v77 = vshll.u32 %v37, 8
    %v78 = vmul.u32.u64.compose %v77, %v76
    %v79 = vextract.low.u32 %v78
    %v80 = vextract.high.u32 %v78
    %v81 = vmul.u32.u64.compose %v77, %v72
    %v82 = vextract.low.u32 %v81
    %v83 = vextract.high.u32 %v81
    %v84 = vmul.u32 %v77, %v68
    %v85 = vadd.s32 %v80, %v82
    %vm86 = vc.u32 %v80, %v82
    %v87 = vadd.s32 %v83, 1
    %v88 = vsel %vm86, %v87, %v83
    %v89 = vadd.s32 %v84, %v88
    %v90 = vadd.s32 %v89, 536870912
    %v91 = vshrl.u32 %v90, 30
    %v92 = vshll.u32 %v91, 30
    %v93 = vsub.s32 %v89, %v92
    %vm94 = vcmp.lt.s32.totalorder %v93, 0
    %v95 = vsub.s32 0, %v93
    %v96 = vsel %vm94, %v95, %v93
    %v97 = vclz %v96
    %v98 = vsub.s32 %v97, 2
    %vm99 = vcmp.gt.s32.totalorder 0, %v98
    %v100 = vsel %vm99, 0, %v98
    %v101 = vsub.s32 32, %v100
    %v102 = vshll.u32 %v93, %v100
    %v103 = vshrl.u32 %v85, %v101
    %v104 = vor.u32 %v102, %v103
    %v105 = vsub.s32 4294967266, %v100
    %v106 = vadd.s32 %v105, 127
    %v107 = vshll.u32 %v106, 23
    %v108 = vor.u32 4788187, %v107
    %v109 = vand.u32 2147483647, %v108
    %v111 = vcvt.s32.f32 %v104
    %v112 = vmul.f32 %v111, %v109
    %v113 = vxor.u32 %v112, 2147483648
    %v114 = vsel %vm31, %v113, %v112
    %v115 = vsub.s32 4, %v91
    %v116 = vsel %vm31, %v115, %v91
    %v117 = vsel %vm30, %v21, %v114
    %v118 = vsel %vm30, 0, %v116
    %v119 = vcosq.f32.pop %v117
    %v120 = vsinq.f32.pop %v117
    %vm121 = vweird.f32 %v21
    %v122 = vadd.s32 %v118, 3
    %v123 = vand.u32 %v122, 3
    %vm124 = vcmp.lt.s32.totalorder %v123, 2
    %vm125 = vcmp.eq.s32.totalorder %v123, 0
    %v126 = vxor.u32 %v120, 2147483648
    %v127 = vsel %vm125, %v119, %v126
    %vm128 = vcmp.eq.s32.totalorder %v123, 2
    %v129 = vxor.u32 %v119, 2147483648
    %v130 = vsel %vm128, %v129, %v120
    %v131 = vsel %vm124, %v127, %v130
    %v132 = vsel %vm121, nan, %v131
    %v133 = vand.u32 2147483647, %v22
    %vm134 = vcmp.le.f32.partialorder %v133, 0.7853982
    %vm135 = vcmp.lt.s32.totalorder %v22, 0
    %v136 = vand.u32 %v22, 2139095040
    %v137 = vshrl.u32 %v136, 23
    %v138 = vsub.s32 %v137, 127
    %v139 = vand.u32 2147483647, %v22
    %v140 = vand.u32 %v139, 8388607
    %v141 = vor.u32 %v140, 8388608
    %v142 = vsub.s32 0, %v141
    %v143 = vadd.s32 %v138, 1
    %vm144 = vcmp.gt.s32.totalorder %v143, 0
    %v145 = vsel %vm144, %v143, 0
    %v146 = vshrl.u32 %v145, 5
    %v147 = vand.u32 %v145, 31
    %v148 = vsub.s32 32, %v147
    %v149 = vshrl.u32 683565275, %v148
    %v150 = vshll.u32 683565275, %v147
    %v151 = vshrl.u32 2475754826, %v148
    %v152 = vor.u32 %v150, %v151
    %v153 = vshll.u32 2475754826, %v147
    %v154 = vshrl.u32 2131351028, %v148
    %v155 = vor.u32 %v153, %v154
    %v156 = vshll.u32 2131351028, %v147
    %v157 = vshrl.u32 2102212464, %v148
    %v158 = vor.u32 %v156, %v157
    %v159 = vshll.u32 2102212464, %v147
    %v160 = vshrl.u32 920167782, %v148
    %v161 = vor.u32 %v159, %v160
    %v162 = vshll.u32 920167782, %v147
    %v163 = vshrl.u32 1326507024, %v148
    %v164 = vor.u32 %v162, %v163
    %vm165 = vcmp.lt.s32.totalorder %v146, 1
    %vm166 = vcmp.lt.s32.totalorder %v146, 2
    %vm167 = vcmp.lt.s32.totalorder %v146, 3
    %vm168 = vcmp.lt.s32.totalorder %v146, 4
    %v169 = vsel %vm165, %v149, %v152
    %v170 = vsel %vm168, %v158, 2102212464
    %v171 = vsel %vm167, %v155, %v170
    %v172 = vsel %vm166, %v169, %v171
    %v173 = vsel %vm165, %v152, %v155
    %v174 = vsel %vm168, %v161, 920167782
    %v175 = vsel %vm167, %v158, %v174
    %v176 = vsel %vm166, %v173, %v175
    %v177 = vsel %vm165, %v155, %v158
    %v178 = vsel %vm168, %v164, 1326507024
    %v179 = vsel %vm167, %v161, %v178
    %v180 = vsel %vm166, %v177, %v179
    %v181 = vshll.u32 %v141, 8
    %v182 = vmul.u32.u64.compose %v181, %v180
    %v183 = vextract.low.u32 %v182
    %v184 = vextract.high.u32 %v182
    %v185 = vmul.u32.u64.compose %v181, %v176
    %v186 = vextract.low.u32 %v185
    %v187 = vextract.high.u32 %v185
    %v188 = vmul.u32 %v181, %v172
    %v189 = vadd.s32 %v184, %v186
    %vm190 = vc.u32 %v184, %v186
    %v191 = vadd.s32 %v187, 1
    %v192 = vsel %vm190, %v191, %v187
    %v193 = vadd.s32 %v188, %v192
    %v194 = vadd.s32 %v193, 536870912
    %v195 = vshrl.u32 %v194, 30
    %v196 = vshll.u32 %v195, 30
    %v197 = vsub.s32 %v193, %v196
    %vm198 = vcmp.lt.s32.totalorder %v197, 0
    %v199 = vsub.s32 0, %v197
    %v200 = vsel %vm198, %v199, %v197
    %v201 = vclz %v200
    %v202 = vsub.s32 %v201, 2
    %vm203 = vcmp.gt.s32.totalorder 0, %v202
    %v204 = vsel %vm203, 0, %v202
    %v205 = vsub.s32 32, %v204
    %v206 = vshll.u32 %v197, %v204
    %v207 = vshrl.u32 %v189, %v205
    %v208 = vor.u32 %v206, %v207
    %v209 = vsub.s32 4294967266, %v204
    %v210 = vadd.s32 %v209, 127
    %v211 = vshll.u32 %v210, 23
    %v212 = vor.u32 4788187, %v211
    %v213 = vand.u32 2147483647, %v212
    %v215 = vcvt.s32.f32 %v208
    %v216 = vmul.f32 %v215, %v213
    %v217 = vxor.u32 %v216, 2147483648
    %v218 = vsel %vm135, %v217, %v216
    %v219 = vsub.s32 4, %v195
    %v220 = vsel %vm135, %v219, %v195
    %v221 = vsel %vm134, %v22, %v218
    %v222 = vsel %vm134, 0, %v220
    %v223 = vcosq.f32.pop %v221
    %v224 = vsinq.f32.pop %v221
    %vm225 = vweird.f32 %v22
    %v226 = vadd.s32 %v222, 3
    %v227 = vand.u32 %v226, 3
    %vm228 = vcmp.lt.s32.totalorder %v227, 2
    %vm229 = vcmp.eq.s32.totalorder %v227, 0
    %v230 = vxor.u32 %v224, 2147483648
    %v231 = vsel %vm229, %v223, %v230
    %vm232 = vcmp.eq.s32.totalorder %v227, 2
    %v233 = vxor.u32 %v223, 2147483648
    %v234 = vsel %vm232, %v233, %v224
    %v235 = vsel %vm228, %v231, %v234
    %v236 = vsel %vm225, nan, %v235
    %v237 = vand.u32 2147483647, %v23
    %vm238 = vcmp.le.f32.partialorder %v237, 0.7853982
    %vm239 = vcmp.lt.s32.totalorder %v23, 0
    %v240 = vand.u32 %v23, 2139095040
    %v241 = vshrl.u32 %v240, 23
    %v242 = vsub.s32 %v241, 127
    %v243 = vand.u32 2147483647, %v23
    %v244 = vand.u32 %v243, 8388607
    %v245 = vor.u32 %v244, 8388608
    %v246 = vsub.s32 0, %v245
    %v247 = vadd.s32 %v242, 1
    %vm248 = vcmp.gt.s32.totalorder %v247, 0
    %v249 = vsel %vm248, %v247, 0
    %v250 = vshrl.u32 %v249, 5
    %v251 = vand.u32 %v249, 31
    %v252 = vsub.s32 32, %v251
    %v253 = vshrl.u32 683565275, %v252
    %v254 = vshll.u32 683565275, %v251
    %v255 = vshrl.u32 2475754826, %v252
    %v256 = vor.u32 %v254, %v255
    %v257 = vshll.u32 2475754826, %v251
    %v258 = vshrl.u32 2131351028, %v252
    %v259 = vor.u32 %v257, %v258
    %v260 = vshll.u32 2131351028, %v251
    %v261 = vshrl.u32 2102212464, %v252
    %v262 = vor.u32 %v260, %v261
    %v263 = vshll.u32 2102212464, %v251
    %v264 = vshrl.u32 920167782, %v252
    %v265 = vor.u32 %v263, %v264
    %v266 = vshll.u32 920167782, %v251
    %v267 = vshrl.u32 1326507024, %v252
    %v268 = vor.u32 %v266, %v267
    %vm269 = vcmp.lt.s32.totalorder %v250, 1
    %vm270 = vcmp.lt.s32.totalorder %v250, 2
    %vm271 = vcmp.lt.s32.totalorder %v250, 3
    %vm272 = vcmp.lt.s32.totalorder %v250, 4
    %v273 = vsel %vm269, %v253, %v256
    %v274 = vsel %vm272, %v262, 2102212464
    %v275 = vsel %vm271, %v259, %v274
    %v276 = vsel %vm270, %v273, %v275
    %v277 = vsel %vm269, %v256, %v259
    %v278 = vsel %vm272, %v265, 920167782
    %v279 = vsel %vm271, %v262, %v278
    %v280 = vsel %vm270, %v277, %v279
    %v281 = vsel %vm269, %v259, %v262
    %v282 = vsel %vm272, %v268, 1326507024
    %v283 = vsel %vm271, %v265, %v282
    %v284 = vsel %vm270, %v281, %v283
    %v285 = vshll.u32 %v245, 8
    %v286 = vmul.u32.u64.compose %v285, %v284
    %v287 = vextract.low.u32 %v286
    %v288 = vextract.high.u32 %v286
    %v289 = vmul.u32.u64.compose %v285, %v280
    %v290 = vextract.low.u32 %v289
    %v291 = vextract.high.u32 %v289
    %v292 = vmul.u32 %v285, %v276
    %v293 = vadd.s32 %v288, %v290
    %vm294 = vc.u32 %v288, %v290
    %v295 = vadd.s32 %v291, 1
    %v296 = vsel %vm294, %v295, %v291
    %v297 = vadd.s32 %v292, %v296
    %v298 = vadd.s32 %v297, 536870912
    %v299 = vshrl.u32 %v298, 30
    %v300 = vshll.u32 %v299, 30
    %v301 = vsub.s32 %v297, %v300
    %vm302 = vcmp.lt.s32.totalorder %v301, 0
    %v303 = vsub.s32 0, %v301
    %v304 = vsel %vm302, %v303, %v301
    %v305 = vclz %v304
    %v306 = vsub.s32 %v305, 2
    %vm307 = vcmp.gt.s32.totalorder 0, %v306
    %v308 = vsel %vm307, 0, %v306
    %v309 = vsub.s32 32, %v308
    %v310 = vshll.u32 %v301, %v308
    %v311 = vshrl.u32 %v293, %v309
    %v312 = vor.u32 %v310, %v311
    %v313 = vsub.s32 4294967266, %v308
    %v314 = vadd.s32 %v313, 127
    %v315 = vshll.u32 %v314, 23
    %v316 = vor.u32 4788187, %v315
    %v317 = vand.u32 2147483647, %v316
    %v319 = vcvt.s32.f32 %v312
    %v320 = vmul.f32 %v319, %v317
    %v321 = vxor.u32 %v320, 2147483648
    %v322 = vsel %vm239, %v321, %v320
    %v323 = vsub.s32 4, %v299
    %v324 = vsel %vm239, %v323, %v299
    %v325 = vsel %vm238, %v23, %v322
    %v326 = vsel %vm238, 0, %v324
    %v327 = vcosq.f32.pop %v325
    %v328 = vsinq.f32.pop %v325
    %vm329 = vweird.f32 %v23
    %v330 = vadd.s32 %v326, 3
    %v331 = vand.u32 %v330, 3
    %vm332 = vcmp.lt.s32.totalorder %v331, 2
    %vm333 = vcmp.eq.s32.totalorder %v331, 0
    %v334 = vxor.u32 %v328, 2147483648
    %v335 = vsel %vm333, %v327, %v334
    %vm336 = vcmp.eq.s32.totalorder %v331, 2
    %v337 = vxor.u32 %v327, 2147483648
    %v338 = vsel %vm336, %v337, %v328
    %v339 = vsel %vm332, %v335, %v338
    %v340 = vsel %vm329, nan, %v339
    %v341 = vand.u32 2147483647, %v24
    %vm342 = vcmp.le.f32.partialorder %v341, 0.7853982
    %vm343 = vcmp.lt.s32.totalorder %v24, 0
    %v344 = vand.u32 %v24, 2139095040
    %v345 = vshrl.u32 %v344, 23
    %v346 = vsub.s32 %v345, 127
    %v347 = vand.u32 2147483647, %v24
    %v348 = vand.u32 %v347, 8388607
    %v349 = vor.u32 %v348, 8388608
    %v350 = vsub.s32 0, %v349
    %v351 = vadd.s32 %v346, 1
    %vm352 = vcmp.gt.s32.totalorder %v351, 0
    %v353 = vsel %vm352, %v351, 0
    %v354 = vshrl.u32 %v353, 5
    %v355 = vand.u32 %v353, 31
    %v356 = vsub.s32 32, %v355
    %v357 = vshrl.u32 683565275, %v356
    %v358 = vshll.u32 683565275, %v355
    %v359 = vshrl.u32 2475754826, %v356
    %v360 = vor.u32 %v358, %v359
    %v361 = vshll.u32 2475754826, %v355
    %v362 = vshrl.u32 2131351028, %v356
    %v363 = vor.u32 %v361, %v362
    %v364 = vshll.u32 2131351028, %v355
    %v365 = vshrl.u32 2102212464, %v356
    %v366 = vor.u32 %v364, %v365
    %v367 = vshll.u32 2102212464, %v355
    %v368 = vshrl.u32 920167782, %v356
    %v369 = vor.u32 %v367, %v368
    %v370 = vshll.u32 920167782, %v355
    %v371 = vshrl.u32 1326507024, %v356
    %v372 = vor.u32 %v370, %v371
    %vm373 = vcmp.lt.s32.totalorder %v354, 1
    %vm374 = vcmp.lt.s32.totalorder %v354, 2
    %vm375 = vcmp.lt.s32.totalorder %v354, 3
    %vm376 = vcmp.lt.s32.totalorder %v354, 4
    %v377 = vsel %vm373, %v357, %v360
    %v378 = vsel %vm376, %v366, 2102212464
    %v379 = vsel %vm375, %v363, %v378
    %v380 = vsel %vm374, %v377, %v379
    %v381 = vsel %vm373, %v360, %v363
    %v382 = vsel %vm376, %v369, 920167782
    %v383 = vsel %vm375, %v366, %v382
    %v384 = vsel %vm374, %v381, %v383
    %v385 = vsel %vm373, %v363, %v366
    %v386 = vsel %vm376, %v372, 1326507024
    %v387 = vsel %vm375, %v369, %v386
    %v388 = vsel %vm374, %v385, %v387
    %v389 = vshll.u32 %v349, 8
    %v390 = vmul.u32.u64.compose %v389, %v388
    %v391 = vextract.low.u32 %v390
    %v392 = vextract.high.u32 %v390
    %v393 = vmul.u32.u64.compose %v389, %v384
    %v394 = vextract.low.u32 %v393
    %v395 = vextract.high.u32 %v393
    %v396 = vmul.u32 %v389, %v380
    %v397 = vadd.s32 %v392, %v394
    %vm398 = vc.u32 %v392, %v394
    %v399 = vadd.s32 %v395, 1
    %v400 = vsel %vm398, %v399, %v395
    %v401 = vadd.s32 %v396, %v400
    %v402 = vadd.s32 %v401, 536870912
    %v403 = vshrl.u32 %v402, 30
    %v404 = vshll.u32 %v403, 30
    %v405 = vsub.s32 %v401, %v404
    %vm406 = vcmp.lt.s32.totalorder %v405, 0
    %v407 = vsub.s32 0, %v405
    %v408 = vsel %vm406, %v407, %v405
    %v409 = vclz %v408
    %v410 = vsub.s32 %v409, 2
    %vm411 = vcmp.gt.s32.totalorder 0, %v410
    %v412 = vsel %vm411, 0, %v410
    %v413 = vsub.s32 32, %v412
    %v414 = vshll.u32 %v405, %v412
    %v415 = vshrl.u32 %v397, %v413
    %v416 = vor.u32 %v414, %v415
    %v417 = vsub.s32 4294967266, %v412
    %v418 = vadd.s32 %v417, 127
    %v419 = vshll.u32 %v418, 23
    %v420 = vor.u32 4788187, %v419
    %v421 = vand.u32 2147483647, %v420
    %v423 = vcvt.s32.f32 %v416
    %v424 = vmul.f32 %v423, %v421
    %v425 = vxor.u32 %v424, 2147483648
    %v426 = vsel %vm343, %v425, %v424
    %v427 = vsub.s32 4, %v403
    %v428 = vsel %vm343, %v427, %v403
    %v429 = vsel %vm342, %v24, %v426
    %v430 = vsel %vm342, 0, %v428
    %v431 = vcosq.f32.pop %v429
    %v432 = vsinq.f32.pop %v429
    %vm433 = vweird.f32 %v24
    %v434 = vadd.s32 %v430, 3
    %v435 = vand.u32 %v434, 3
    %vm436 = vcmp.lt.s32.totalorder %v435, 2
    %vm437 = vcmp.eq.s32.totalorder %v435, 0
    %v438 = vxor.u32 %v432, 2147483648
    %v439 = vsel %vm437, %v431, %v438
    %vm440 = vcmp.eq.s32.totalorder %v435, 2
    %v441 = vxor.u32 %v431, 2147483648
    %v442 = vsel %vm440, %v441, %v432
    %v443 = vsel %vm436, %v439, %v442
    %v444 = vsel %vm433, nan, %v443
    %v445 = vand.u32 2147483647, %v21
    %vm446 = vcmp.le.f32.partialorder %v445, 0.7853982
    %vm447 = vcmp.lt.s32.totalorder %v21, 0
    %v448 = vand.u32 %v21, 2139095040
    %v449 = vshrl.u32 %v448, 23
    %v450 = vsub.s32 %v449, 127
    %v451 = vand.u32 2147483647, %v21
    %v452 = vand.u32 %v451, 8388607
    %v453 = vor.u32 %v452, 8388608
    %v454 = vsub.s32 0, %v453
    %v455 = vadd.s32 %v450, 1
    %vm456 = vcmp.gt.s32.totalorder %v455, 0
    %v457 = vsel %vm456, %v455, 0
    %v458 = vshrl.u32 %v457, 5
    %v459 = vand.u32 %v457, 31
    %v460 = vsub.s32 32, %v459
    %v461 = vshrl.u32 683565275, %v460
    %v462 = vshll.u32 683565275, %v459
    %v463 = vshrl.u32 2475754826, %v460
    %v464 = vor.u32 %v462, %v463
    %v465 = vshll.u32 2475754826, %v459
    %v466 = vshrl.u32 2131351028, %v460
    %v467 = vor.u32 %v465, %v466
    %v468 = vshll.u32 2131351028, %v459
    %v469 = vshrl.u32 2102212464, %v460
    %v470 = vor.u32 %v468, %v469
    %v471 = vshll.u32 2102212464, %v459
    %v472 = vshrl.u32 920167782, %v460
    %v473 = vor.u32 %v471, %v472
    %v474 = vshll.u32 920167782, %v459
    %v475 = vshrl.u32 1326507024, %v460
    %v476 = vor.u32 %v474, %v475
    %vm477 = vcmp.lt.s32.totalorder %v458, 1
    %vm478 = vcmp.lt.s32.totalorder %v458, 2
    %vm479 = vcmp.lt.s32.totalorder %v458, 3
    %vm480 = vcmp.lt.s32.totalorder %v458, 4
    %v481 = vsel %vm477, %v461, %v464
    %v482 = vsel %vm480, %v470, 2102212464
    %v483 = vsel %vm479, %v467, %v482
    %v484 = vsel %vm478, %v481, %v483
    %v485 = vsel %vm477, %v464, %v467
    %v486 = vsel %vm480, %v473, 920167782
    %v487 = vsel %vm479, %v470, %v486
    %v488 = vsel %vm478, %v485, %v487
    %v489 = vsel %vm477, %v467, %v470
    %v490 = vsel %vm480, %v476, 1326507024
    %v491 = vsel %vm479, %v473, %v490
    %v492 = vsel %vm478, %v489, %v491
    %v493 = vshll.u32 %v453, 8
    %v494 = vmul.u32.u64.compose %v493, %v492
    %v495 = vextract.low.u32 %v494
    %v496 = vextract.high.u32 %v494
    %v497 = vmul.u32.u64.compose %v493, %v488
    %v498 = vextract.low.u32 %v497
    %v499 = vextract.high.u32 %v497
    %v500 = vmul.u32 %v493, %v484
    %v501 = vadd.s32 %v496, %v498
    %vm502 = vc.u32 %v496, %v498
    %v503 = vadd.s32 %v499, 1
    %v504 = vsel %vm502, %v503, %v499
    %v505 = vadd.s32 %v500, %v504
    %v506 = vadd.s32 %v505, 536870912
    %v507 = vshrl.u32 %v506, 30
    %v508 = vshll.u32 %v507, 30
    %v509 = vsub.s32 %v505, %v508
    %vm510 = vcmp.lt.s32.totalorder %v509, 0
    %v511 = vsub.s32 0, %v509
    %v512 = vsel %vm510, %v511, %v509
    %v513 = vclz %v512
    %v514 = vsub.s32 %v513, 2
    %vm515 = vcmp.gt.s32.totalorder 0, %v514
    %v516 = vsel %vm515, 0, %v514
    %v517 = vsub.s32 32, %v516
    %v518 = vshll.u32 %v509, %v516
    %v519 = vshrl.u32 %v501, %v517
    %v520 = vor.u32 %v518, %v519
    %v521 = vsub.s32 4294967266, %v516
    %v522 = vadd.s32 %v521, 127
    %v523 = vshll.u32 %v522, 23
    %v524 = vor.u32 4788187, %v523
    %v525 = vand.u32 2147483647, %v524
    %v527 = vcvt.s32.f32 %v520
    %v528 = vmul.f32 %v527, %v525
    %v529 = vxor.u32 %v528, 2147483648
    %v530 = vsel %vm447, %v529, %v528
    %v531 = vsub.s32 4, %v507
    %v532 = vsel %vm447, %v531, %v507
    %v533 = vsel %vm446, %v21, %v530
    %v534 = vsel %vm446, 0, %v532
    %v535 = vcosq.f32.pop %v533
    %v536 = vsinq.f32.pop %v533
    %vm537 = vweird.f32 %v21
    %v538 = vand.u32 %v534, 3
    %vm539 = vcmp.lt.s32.totalorder %v538, 2
    %vm540 = vcmp.eq.s32.totalorder %v538, 0
    %v541 = vxor.u32 %v536, 2147483648
    %v542 = vsel %vm540, %v535, %v541
    %vm543 = vcmp.eq.s32.totalorder %v538, 2
    %v544 = vxor.u32 %v535, 2147483648
    %v545 = vsel %vm543, %v544, %v536
    %v546 = vsel %vm539, %v542, %v545
    %v547 = vsel %vm537, nan, %v546
    %v548 = vand.u32 2147483647, %v22
    %vm549 = vcmp.le.f32.partialorder %v548, 0.7853982
    %vm550 = vcmp.lt.s32.totalorder %v22, 0
    %v551 = vand.u32 %v22, 2139095040
    %v552 = vshrl.u32 %v551, 23
    %v553 = vsub.s32 %v552, 127
    %v554 = vand.u32 2147483647, %v22
    %v555 = vand.u32 %v554, 8388607
    %v556 = vor.u32 %v555, 8388608
    %v557 = vsub.s32 0, %v556
    %v558 = vadd.s32 %v553, 1
    %vm559 = vcmp.gt.s32.totalorder %v558, 0
    %v560 = vsel %vm559, %v558, 0
    %v561 = vshrl.u32 %v560, 5
    %v562 = vand.u32 %v560, 31
    %v563 = vsub.s32 32, %v562
    %v564 = vshrl.u32 683565275, %v563
    %v565 = vshll.u32 683565275, %v562
    %v566 = vshrl.u32 2475754826, %v563
    %v567 = vor.u32 %v565, %v566
    %v568 = vshll.u32 2475754826, %v562
    %v569 = vshrl.u32 2131351028, %v563
    %v570 = vor.u32 %v568, %v569
    %v571 = vshll.u32 2131351028, %v562
    %v572 = vshrl.u32 2102212464, %v563
    %v573 = vor.u32 %v571, %v572
    %v574 = vshll.u32 2102212464, %v562
    %v575 = vshrl.u32 920167782, %v563
    %v576 = vor.u32 %v574, %v575
    %v577 = vshll.u32 920167782, %v562
    %v578 = vshrl.u32 1326507024, %v563
    %v579 = vor.u32 %v577, %v578
    %vm580 = vcmp.lt.s32.totalorder %v561, 1
    %vm581 = vcmp.lt.s32.totalorder %v561, 2
    %vm582 = vcmp.lt.s32.totalorder %v561, 3
    %vm583 = vcmp.lt.s32.totalorder %v561, 4
    %v584 = vsel %vm580, %v564, %v567
    %v585 = vsel %vm583, %v573, 2102212464
    %v586 = vsel %vm582, %v570, %v585
    %v587 = vsel %vm581, %v584, %v586
    %v588 = vsel %vm580, %v567, %v570
    %v589 = vsel %vm583, %v576, 920167782
    %v590 = vsel %vm582, %v573, %v589
    %v591 = vsel %vm581, %v588, %v590
    %v592 = vsel %vm580, %v570, %v573
    %v593 = vsel %vm583, %v579, 1326507024
    %v594 = vsel %vm582, %v576, %v593
    %v595 = vsel %vm581, %v592, %v594
    %v596 = vshll.u32 %v556, 8
    %v597 = vmul.u32.u64.compose %v596, %v595
    %v598 = vextract.low.u32 %v597
    %v599 = vextract.high.u32 %v597
    %v600 = vmul.u32.u64.compose %v596, %v591
    %v601 = vextract.low.u32 %v600
    %v602 = vextract.high.u32 %v600
    %v603 = vmul.u32 %v596, %v587
    %v604 = vadd.s32 %v599, %v601
    %vm605 = vc.u32 %v599, %v601
    %v606 = vadd.s32 %v602, 1
    %v607 = vsel %vm605, %v606, %v602
    %v608 = vadd.s32 %v603, %v607
    %v609 = vadd.s32 %v608, 536870912
    %v610 = vshrl.u32 %v609, 30
    %v611 = vshll.u32 %v610, 30
    %v612 = vsub.s32 %v608, %v611
    %vm613 = vcmp.lt.s32.totalorder %v612, 0
    %v614 = vsub.s32 0, %v612
    %v615 = vsel %vm613, %v614, %v612
    %v616 = vclz %v615
    %v617 = vsub.s32 %v616, 2
    %vm618 = vcmp.gt.s32.totalorder 0, %v617
    %v619 = vsel %vm618, 0, %v617
    %v620 = vsub.s32 32, %v619
    %v621 = vshll.u32 %v612, %v619
    %v622 = vshrl.u32 %v604, %v620
    %v623 = vor.u32 %v621, %v622
    %v624 = vsub.s32 4294967266, %v619
    %v625 = vadd.s32 %v624, 127
    %v626 = vshll.u32 %v625, 23
    %v627 = vor.u32 4788187, %v626
    %v628 = vand.u32 2147483647, %v627
    %v630 = vcvt.s32.f32 %v623
    %v631 = vmul.f32 %v630, %v628
    %v632 = vxor.u32 %v631, 2147483648
    %v633 = vsel %vm550, %v632, %v631
    %v634 = vsub.s32 4, %v610
    %v635 = vsel %vm550, %v634, %v610
    %v636 = vsel %vm549, %v22, %v633
    %v637 = vsel %vm549, 0, %v635
    %v638 = vcosq.f32.pop %v636
    %v639 = vsinq.f32.pop %v636
    %vm640 = vweird.f32 %v22
    %v641 = vand.u32 %v637, 3
    %vm642 = vcmp.lt.s32.totalorder %v641, 2
    %vm643 = vcmp.eq.s32.totalorder %v641, 0
    %v644 = vxor.u32 %v639, 2147483648
    %v645 = vsel %vm643, %v638, %v644
    %vm646 = vcmp.eq.s32.totalorder %v641, 2
    %v647 = vxor.u32 %v638, 2147483648
    %v648 = vsel %vm646, %v647, %v639
    %v649 = vsel %vm642, %v645, %v648
    %v650 = vsel %vm640, nan, %v649
    %v651 = vand.u32 2147483647, %v23
    %vm652 = vcmp.le.f32.partialorder %v651, 0.7853982
    %vm653 = vcmp.lt.s32.totalorder %v23, 0
    %v654 = vand.u32 %v23, 2139095040
    %v655 = vshrl.u32 %v654, 23
    %v656 = vsub.s32 %v655, 127
    %v657 = vand.u32 2147483647, %v23
    %v658 = vand.u32 %v657, 8388607
    %v659 = vor.u32 %v658, 8388608
    %v660 = vsub.s32 0, %v659
    %v661 = vadd.s32 %v656, 1
    %vm662 = vcmp.gt.s32.totalorder %v661, 0
    %v663 = vsel %vm662, %v661, 0
    %v664 = vshrl.u32 %v663, 5
    %v665 = vand.u32 %v663, 31
    %v666 = vsub.s32 32, %v665
    %v667 = vshrl.u32 683565275, %v666
    %v668 = vshll.u32 683565275, %v665
    %v669 = vshrl.u32 2475754826, %v666
    %v670 = vor.u32 %v668, %v669
    %v671 = vshll.u32 2475754826, %v665
    %v672 = vshrl.u32 2131351028, %v666
    %v673 = vor.u32 %v671, %v672
    %v674 = vshll.u32 2131351028, %v665
    %v675 = vshrl.u32 2102212464, %v666
    %v676 = vor.u32 %v674, %v675
    %v677 = vshll.u32 2102212464, %v665
    %v678 = vshrl.u32 920167782, %v666
    %v679 = vor.u32 %v677, %v678
    %v680 = vshll.u32 920167782, %v665
    %v681 = vshrl.u32 1326507024, %v666
    %v682 = vor.u32 %v680, %v681
    %vm683 = vcmp.lt.s32.totalorder %v664, 1
    %vm684 = vcmp.lt.s32.totalorder %v664, 2
    %vm685 = vcmp.lt.s32.totalorder %v664, 3
    %vm686 = vcmp.lt.s32.totalorder %v664, 4
    %v687 = vsel %vm683, %v667, %v670
    %v688 = vsel %vm686, %v676, 2102212464
    %v689 = vsel %vm685, %v673, %v688
    %v690 = vsel %vm684, %v687, %v689
    %v691 = vsel %vm683, %v670, %v673
    %v692 = vsel %vm686, %v679, 920167782
    %v693 = vsel %vm685, %v676, %v692
    %v694 = vsel %vm684, %v691, %v693
    %v695 = vsel %vm683, %v673, %v676
    %v696 = vsel %vm686, %v682, 1326507024
    %v697 = vsel %vm685, %v679, %v696
    %v698 = vsel %vm684, %v695, %v697
    %v699 = vshll.u32 %v659, 8
    %v700 = vmul.u32.u64.compose %v699, %v698
    %v701 = vextract.low.u32 %v700
    %v702 = vextract.high.u32 %v700
    %v703 = vmul.u32.u64.compose %v699, %v694
    %v704 = vextract.low.u32 %v703
    %v705 = vextract.high.u32 %v703
    %v706 = vmul.u32 %v699, %v690
    %v707 = vadd.s32 %v702, %v704
    %vm708 = vc.u32 %v702, %v704
    %v709 = vadd.s32 %v705, 1
    %v710 = vsel %vm708, %v709, %v705
    %v711 = vadd.s32 %v706, %v710
    %v712 = vadd.s32 %v711, 536870912
    %v713 = vshrl.u32 %v712, 30
    %v714 = vshll.u32 %v713, 30
    %v715 = vsub.s32 %v711, %v714
    %vm716 = vcmp.lt.s32.totalorder %v715, 0
    %v717 = vsub.s32 0, %v715
    %v718 = vsel %vm716, %v717, %v715
    %v719 = vclz %v718
    %v720 = vsub.s32 %v719, 2
    %vm721 = vcmp.gt.s32.totalorder 0, %v720
    %v722 = vsel %vm721, 0, %v720
    %v723 = vsub.s32 32, %v722
    %v724 = vshll.u32 %v715, %v722
    %v725 = vshrl.u32 %v707, %v723
    %v726 = vor.u32 %v724, %v725
    %v727 = vsub.s32 4294967266, %v722
    %v728 = vadd.s32 %v727, 127
    %v729 = vshll.u32 %v728, 23
    %v730 = vor.u32 4788187, %v729
    %v731 = vand.u32 2147483647, %v730
    %v733 = vcvt.s32.f32 %v726
    %v734 = vmul.f32 %v733, %v731
    %v735 = vxor.u32 %v734, 2147483648
    %v736 = vsel %vm653, %v735, %v734
    %v737 = vsub.s32 4, %v713
    %v738 = vsel %vm653, %v737, %v713
    %v739 = vsel %vm652, %v23, %v736
    %v740 = vsel %vm652, 0, %v738
    %v741 = vcosq.f32.pop %v739
    %v742 = vsinq.f32.pop %v739
    %vm743 = vweird.f32 %v23
    %v744 = vand.u32 %v740, 3
    %vm745 = vcmp.lt.s32.totalorder %v744, 2
    %vm746 = vcmp.eq.s32.totalorder %v744, 0
    %v747 = vxor.u32 %v742, 2147483648
    %v748 = vsel %vm746, %v741, %v747
    %vm749 = vcmp.eq.s32.totalorder %v744, 2
    %v750 = vxor.u32 %v741, 2147483648
    %v751 = vsel %vm749, %v750, %v742
    %v752 = vsel %vm745, %v748, %v751
    %v753 = vsel %vm743, nan, %v752
    %v754 = vand.u32 2147483647, %v24
    %vm755 = vcmp.le.f32.partialorder %v754, 0.7853982
    %vm756 = vcmp.lt.s32.totalorder %v24, 0
    %v757 = vand.u32 %v24, 2139095040
    %v758 = vshrl.u32 %v757, 23
    %v759 = vsub.s32 %v758, 127
    %v760 = vand.u32 2147483647, %v24
    %v761 = vand.u32 %v760, 8388607
    %v762 = vor.u32 %v761, 8388608
    %v763 = vsub.s32 0, %v762
    %v764 = vadd.s32 %v759, 1
    %vm765 = vcmp.gt.s32.totalorder %v764, 0
    %v766 = vsel %vm765, %v764, 0
    %v767 = vshrl.u32 %v766, 5
    %v768 = vand.u32 %v766, 31
    %v769 = vsub.s32 32, %v768
    %v770 = vshrl.u32 683565275, %v769
    %v771 = vshll.u32 683565275, %v768
    %v772 = vshrl.u32 2475754826, %v769
    %v773 = vor.u32 %v771, %v772
    %v774 = vshll.u32 2475754826, %v768
    %v775 = vshrl.u32 2131351028, %v769
    %v776 = vor.u32 %v774, %v775
    %v777 = vshll.u32 2131351028, %v768
    %v778 = vshrl.u32 2102212464, %v769
    %v779 = vor.u32 %v777, %v778
    %v780 = vshll.u32 2102212464, %v768
    %v781 = vshrl.u32 920167782, %v769
    %v782 = vor.u32 %v780, %v781
    %v783 = vshll.u32 920167782, %v768
    %v784 = vshrl.u32 1326507024, %v769
    %v785 = vor.u32 %v783, %v784
    %vm786 = vcmp.lt.s32.totalorder %v767, 1
    %vm787 = vcmp.lt.s32.totalorder %v767, 2
    %vm788 = vcmp.lt.s32.totalorder %v767, 3
    %vm789 = vcmp.lt.s32.totalorder %v767, 4
    %v790 = vsel %vm786, %v770, %v773
    %v791 = vsel %vm789, %v779, 2102212464
    %v792 = vsel %vm788, %v776, %v791
    %v793 = vsel %vm787, %v790, %v792
    %v794 = vsel %vm786, %v773, %v776
    %v795 = vsel %vm789, %v782, 920167782
    %v796 = vsel %vm788, %v779, %v795
    %v797 = vsel %vm787, %v794, %v796
    %v798 = vsel %vm786, %v776, %v779
    %v799 = vsel %vm789, %v785, 1326507024
    %v800 = vsel %vm788, %v782, %v799
    %v801 = vsel %vm787, %v798, %v800
    %v802 = vshll.u32 %v762, 8
    %v803 = vmul.u32.u64.compose %v802, %v801
    %v804 = vextract.low.u32 %v803
    %v805 = vextract.high.u32 %v803
    %v806 = vmul.u32.u64.compose %v802, %v797
    %v807 = vextract.low.u32 %v806
    %v808 = vextract.high.u32 %v806
    %v809 = vmul.u32 %v802, %v793
    %v810 = vadd.s32 %v805, %v807
    %vm811 = vc.u32 %v805, %v807
    %v812 = vadd.s32 %v808, 1
    %v813 = vsel %vm811, %v812, %v808
    %v814 = vadd.s32 %v809, %v813
    %v815 = vadd.s32 %v814, 536870912
    %v816 = vshrl.u32 %v815, 30
    %v817 = vshll.u32 %v816, 30
    %v818 = vsub.s32 %v814, %v817
    %vm819 = vcmp.lt.s32.totalorder %v818, 0
    %v820 = vsub.s32 0, %v818
    %v821 = vsel %vm819, %v820, %v818
    %v822 = vclz %v821
    %v823 = vsub.s32 %v822, 2
    %vm824 = vcmp.gt.s32.totalorder 0, %v823
    %v825 = vsel %vm824, 0, %v823
    %v826 = vsub.s32 32, %v825
    %v827 = vshll.u32 %v818, %v825
    %v828 = vshrl.u32 %v810, %v826
    %v829 = vor.u32 %v827, %v828
    %v830 = vsub.s32 4294967266, %v825
    %v831 = vadd.s32 %v830, 127
    %v832 = vshll.u32 %v831, 23
    %v833 = vor.u32 4788187, %v832
    %v834 = vand.u32 2147483647, %v833
    %v836 = vcvt.s32.f32 %v829
    %v837 = vmul.f32 %v836, %v834
    %v838 = vxor.u32 %v837, 2147483648
    %v839 = vsel %vm756, %v838, %v837
    %v840 = vsub.s32 4, %v816
    %v841 = vsel %vm756, %v840, %v816
    %v842 = vsel %vm755, %v24, %v839
    %v843 = vsel %vm755, 0, %v841
    %v844 = vcosq.f32.pop %v842
    %v845 = vsinq.f32.pop %v842
    %vm846 = vweird.f32 %v24
    %v847 = vand.u32 %v843, 3
    %vm848 = vcmp.lt.s32.totalorder %v847, 2
    %vm849 = vcmp.eq.s32.totalorder %v847, 0
    %v850 = vxor.u32 %v845, 2147483648
    %v851 = vsel %vm849, %v844, %v850
    %vm852 = vcmp.eq.s32.totalorder %v847, 2
    %v853 = vxor.u32 %v844, 2147483648
    %v854 = vsel %vm852, %v853, %v845
    %v855 = vsel %vm848, %v851, %v854
    %v856 = vsel %vm846, nan, %v855
    %s857 = scalar_lea.vmem [#allocation5], 32
    %858 = vst [vmem:[%s857] sm:$0xff] %v132
    %859 = vst [vmem:[%s857 + $0x8] sm:$0xff] %v236
    %860 = vst [vmem:[%s857 + $0x10] sm:$0xff] %v340
    %861 = vst [vmem:[%s857 + $0x18] sm:$0xff] %v444
    %s862 = scalar_lea.vmem [#allocation5], 64
    %863 = vst [vmem:[%s862] sm:$0xff] %v547
    %864 = vst [vmem:[%s862 + $0x8] sm:$0xff] %v650
    %865 = vst [vmem:[%s862 + $0x10] sm:$0xff] %v753
    %866 = vst [vmem:[%s862 + $0x18] sm:$0xff] %v856
    %v867 = vmul.f32 %v132, 2.0
    %v868 = vmul.f32 %v236, 2.0
    %v869 = vmul.f32 %v340, 2.0
    %v870 = vmul.f32 %v444, 2.0
    %v871 = vmul.f32 %v867, %v547
    %v872 = vmul.f32 %v868, %v650
    %v873 = vmul.f32 %v869, %v753
    %v874 = vmul.f32 %v870, %v856
    %v875 = vsub.f32 %v547, %v132
    %v876 = vsub.f32 %v650, %v236
    %v877 = vsub.f32 %v753, %v340
    %v878 = vsub.f32 %v856, %v444
    %v879 = vadd.f32 %v547, %v132
    %v880 = vadd.f32 %v650, %v236
    %v881 = vadd.f32 %v753, %v340
    %v882 = vadd.f32 %v856, %v444
    %v883 = vmul.f32 %v875, %v879
    %v884 = vmul.f32 %v876, %v880
    %v885 = vmul.f32 %v877, %v881
    %v886 = vmul.f32 %v878, %v882
    %s887 = scalar_lea.vmem [#allocation5], 96
    %888 = vst [vmem:[%s887] sm:$0xff] %v871
    %889 = vst [vmem:[%s887 + $0x8] sm:$0xff] %v872
    %890 = vst [vmem:[%s887 + $0x10] sm:$0xff] %v873
    %891 = vst [vmem:[%s887 + $0x18] sm:$0xff] %v874
    %s892 = scalar_lea.vmem [#allocation5], 128
    %893 = vst [vmem:[%s892] sm:$0xff] %v883
    %894 = vst [vmem:[%s892 + $0x8] sm:$0xff] %v884
    %895 = vst [vmem:[%s892 + $0x10] sm:$0xff] %v885
    %896 = vst [vmem:[%s892 + $0x18] sm:$0xff] %v886
    %v897 = vmul.f32 %v871, 2.0
    %v898 = vmul.f32 %v872, 2.0
    %v899 = vmul.f32 %v873, 2.0
    %v900 = vmul.f32 %v874, 2.0
    %v901 = vmul.f32 %v897, %v883
    %v902 = vmul.f32 %v898, %v884
    %v903 = vmul.f32 %v899, %v885
    %v904 = vmul.f32 %v900, %v886
    %v905 = vsub.f32 %v883, %v871
    %v906 = vsub.f32 %v884, %v872
    %v907 = vsub.f32 %v885, %v873
    %v908 = vsub.f32 %v886, %v874
    %v909 = vadd.f32 %v883, %v871
    %v910 = vadd.f32 %v884, %v872
    %v911 = vadd.f32 %v885, %v873
    %v912 = vadd.f32 %v886, %v874
    %v913 = vmul.f32 %v905, %v909
    %v914 = vmul.f32 %v906, %v910
    %v915 = vmul.f32 %v907, %v911
    %v916 = vmul.f32 %v908, %v912
    %s917 = scalar_lea.vmem [#allocation5], 160
    %918 = vst [vmem:[%s917] sm:$0xff] %v901
    %919 = vst [vmem:[%s917 + $0x8] sm:$0xff] %v902
    %920 = vst [vmem:[%s917 + $0x10] sm:$0xff] %v903
    %921 = vst [vmem:[%s917 + $0x18] sm:$0xff] %v904
    %s922 = scalar_lea.vmem [#allocation5], 192
    %923 = vst [vmem:[%s922] sm:$0xff] %v913
    %924 = vst [vmem:[%s922 + $0x8] sm:$0xff] %v914
    %925 = vst [vmem:[%s922 + $0x10] sm:$0xff] %v915
    %926 = vst [vmem:[%s922 + $0x18] sm:$0xff] %v916
    %v927 = vmul.f32 %v901, 2.0
    %v928 = vmul.f32 %v902, 2.0
    %v929 = vmul.f32 %v903, 2.0
    %v930 = vmul.f32 %v904, 2.0
    %v931 = vmul.f32 %v927, %v913
    %v932 = vmul.f32 %v928, %v914
    %v933 = vmul.f32 %v929, %v915
    %v934 = vmul.f32 %v930, %v916
    %v935 = vsub.f32 %v913, %v901
    %v936 = vsub.f32 %v914, %v902
    %v937 = vsub.f32 %v915, %v903
    %v938 = vsub.f32 %v916, %v904
    %v939 = vadd.f32 %v913, %v901
    %v940 = vadd.f32 %v914, %v902
    %v941 = vadd.f32 %v915, %v903
    %v942 = vadd.f32 %v916, %v904
    %v943 = vmul.f32 %v935, %v939
    %v944 = vmul.f32 %v936, %v940
    %v945 = vmul.f32 %v937, %v941
    %v946 = vmul.f32 %v938, %v942
    %s947 = scalar_lea.vmem [#allocation5], 224
    %948 = vst [vmem:[%s947] sm:$0xff] %v931
    %949 = vst [vmem:[%s947 + $0x8] sm:$0xff] %v932
    %950 = vst [vmem:[%s947 + $0x10] sm:$0xff] %v933
    %951 = vst [vmem:[%s947 + $0x18] sm:$0xff] %v934
    %s952 = scalar_lea.vmem [#allocation5], 256
    %953 = vst [vmem:[%s952] sm:$0xff] %v943
    %954 = vst [vmem:[%s952 + $0x8] sm:$0xff] %v944
    %955 = vst [vmem:[%s952 + $0x10] sm:$0xff] %v945
    %956 = vst [vmem:[%s952 + $0x18] sm:$0xff] %v946
    // Predicated region
    $region10: #{tpu_custom_call.1} parent=1 // pred_check
      _
    $region11: #{tpu_custom_call.1} parent=1 // pred_check_branch
      %958 = sbr.rel (0) target = $region13
    $region12: #{tpu_custom_call.1} parent=1 // pred_region
      %s960 = ssub.s32 4608, 4608
      %961 = vsyncadd [#allocation4], %s960
      %s962 = sshll.u32 [#allocation5], 4
      %s963 = int_to_ptr.vmem [resolvable:$true] %s962
      %968 = dma.vmem_to_hbm [thread:$0]  %s963, 4608, %s1, [#allocation4], 512, 512, 32
    $region13: #{tpu_custom_call.1} parent=1 // pred_fallthru
      _
    // Predicated region
    $region14: #{tpu_custom_call.1} parent=1 // pred_check
      _
    $region15: #{tpu_custom_call.1} parent=1 // pred_check_branch
      %970 = sbr.rel (0) target = $region17
    $region16: #{tpu_custom_call.1} parent=1 // pred_region
      %971 = dma.done [#allocation4], 4608
    $region17: #{tpu_custom_call.1} parent=1 // pred_fallthru
      _
    %972 = vsyncpa [#allocation3], 1
    %973 = vsyncpa [#allocation4], 1

</llo_original>
